<compile_context>
chip_gen: v5e
topology: v5e:2x2
jax: 0.10.0
libtpu: 0.0.40
codegen_flags: <defaults>
</compile_context>

<pallas_src>
import jax
import jax.numpy as jnp
from jax.experimental import pallas as pl
from jax.experimental.pallas import tpu as pltpu

hidden_sizes = [20, 30, 20]

_PACK = 8  # batch rows packed into the lane axis per packed row


def _round_up(x, m):
    return ((x + m - 1) // m) * m


def _silu(v):
    # sigmoid(v) = 0.5 * (tanh(v/2) + 1): a single EUP transcendental, exact.
    return v * (0.5 * jnp.tanh(0.5 * v) + 0.5)


def kbnn_kernel(iris_ref, freq_ref, w_in_ref, b_in_ref, w_fr_ref, b_fr_ref,
                w2x_ref, w2f_ref, b2_ref, out_ref):
    # All activations are lane-packed: each row holds 8 batch rows side by side.
    x = _silu(jnp.dot(iris_ref[...], w_in_ref[...],
                      preferred_element_type=jnp.float32) + b_in_ref[...])
    f = _silu(jnp.dot(freq_ref[...], w_fr_ref[...],
                      preferred_element_type=jnp.float32) + b_fr_ref[...])
    y = (jnp.dot(x, w2x_ref[...], preferred_element_type=jnp.float32)
         + jnp.dot(f, w2f_ref[...], preferred_element_type=jnp.float32)
         + b2_ref[...])
    out_ref[...] = y.astype(out_ref.dtype)


def fold_params(params, pack=_PACK):
    """One-time offline folding / lane-packing in f32 (param prep, not per call).

      w2x = W_rs @ W_out                      (resize layer folded into output)
      b2  = b_rs @ W_out + b_out
      Every weight is then replicated into a pack-way block-diagonal matrix and
      every bias tiled pack times along the lane axis so that `pack` consecutive
      batch rows can live side-by-side in the lane dimension.
    """
    w_in = params["w_in"].astype(jnp.float32)    # [din, h0]
    w_fr = params["w_fr"].astype(jnp.float32)    # [dfr, h1]
    w_rs = params["w_rs"].astype(jnp.float32)    # [h0, h1]
    w_out = params["w_out"].astype(jnp.float32)  # [h1, O]

    w2x = w_rs @ w_out                           # [h0, O]
    w2f = w_out                                  # [h1, O]
    b2 = (params["b_rs"].astype(jnp.float32) @ w_out
          + params["b_out"].astype(jnp.float32))  # [1, O]

    eye = jnp.eye(pack, dtype=jnp.float32)

    def bd(w):  # [a, b] -> pack-way block-diagonal [pack*a, pack*b]
        a, b = w.shape
        return jnp.einsum("ij,pq->ipjq", eye, w).reshape(pack * a, pack * b)

    def tile_b(b):  # [1, d] -> [1, pack*d]
        return jnp.tile(b.astype(jnp.float32), (1, pack))

    return dict(
        w_in=bd(w_in), b_in=tile_b(params["b_in"]),
        w_fr=bd(w_fr), b_fr=tile_b(params["b_fr"]),
        w2x=bd(w2x), w2f=bd(w2f), b2=tile_b(b2),
        pack=pack,
    )


def kbnn_forward(iris_dims, freq_samples, folded, *, block_rows=2048):
    """folded: output of fold_params(). block_rows is in packed rows (8 batch rows each)."""
    pack = folded["pack"]
    B, din = iris_dims.shape
    _, dfr = freq_samples.shape

    # Pad batch to a multiple of `pack` only when needed; when B % pack == 0 the
    # lane-packing below is a pure metadata reshape (no HBM copy).
    Bp = _round_up(B, pack)
    if Bp != B:
        iris_dims = jnp.pad(iris_dims, ((0, Bp - B), (0, 0)))
        freq_samples = jnp.pad(freq_samples, ((0, Bp - B), (0, 0)))
    rows = Bp // pack

    iris_p = iris_dims.astype(jnp.float32).reshape(rows, pack * din)
    freq_p = freq_samples.astype(jnp.float32).reshape(rows, pack * dfr)

    w_in, b_in = folded["w_in"], folded["b_in"]
    w_fr, b_fr = folded["w_fr"], folded["b_fr"]
    w2x, w2f, b2 = folded["w2x"], folded["w2f"], folded["b2"]
    out_lanes = w2x.shape[1]          # pack * output_size (128 for output_size=16)
    out_dim = out_lanes // pack

    # Large batch tile (multiple of 8 sublanes) to amortize per-step pipeline
    # overhead; ragged last block is masked by Pallas, no explicit padding.
    tb = min(block_rows, _round_up(rows, 8))
    # v7x megacore: keep >=2 grid steps when there is enough work to split.
    if pl.cdiv(rows, tb) < 2 and rows > 8:
        tb = max(8, _round_up(pl.cdiv(rows, 2), 8))
    grid = (pl.cdiv(rows, tb),)

    param_bytes = 4 * sum(int(a.size) for a in (w_in, b_in, w_fr, b_fr, w2x, w2f, b2))
    cost = pl.CostEstimate(
        flops=2 * rows * (w_in.shape[0] * w_in.shape[1]
                          + w_fr.shape[0] * w_fr.shape[1]
                          + w2x.shape[0] * w2x.shape[1]
                          + w2f.shape[0] * w2f.shape[1]),
        transcendentals=rows * (w_in.shape[1] + w_fr.shape[1]),
        bytes_accessed=4 * rows * (pack * din + pack * dfr + out_lanes) + param_bytes,
    )

    out_packed = pl.pallas_call(
        kbnn_kernel,
        out_shape=jax.ShapeDtypeStruct((rows, out_lanes), jnp.float32),
        grid=grid,
        in_specs=[
            pl.BlockSpec((tb, pack * din), lambda i: (i, 0)),   # activations: batch-tiled
            pl.BlockSpec((tb, pack * dfr), lambda i: (i, 0)),
            pl.BlockSpec(w_in.shape, lambda i: (0, 0)),         # weights/biases: VMEM-resident
            pl.BlockSpec(b_in.shape, lambda i: (0, 0)),
            pl.BlockSpec(w_fr.shape, lambda i: (0, 0)),
            pl.BlockSpec(b_fr.shape, lambda i: (0, 0)),
            pl.BlockSpec(w2x.shape, lambda i: (0, 0)),
            pl.BlockSpec(w2f.shape, lambda i: (0, 0)),
            pl.BlockSpec(b2.shape, lambda i: (0, 0)),
        ],
        out_specs=pl.BlockSpec((tb, out_lanes), lambda i: (i, 0)),
        compiler_params=pltpu.CompilerParams(
            dimension_semantics=("parallel",)),
        cost_estimate=cost,
    )(iris_p, freq_p, w_in, b_in, w_fr, b_fr, w2x, w2f, b2)

    # Free metadata reshape back to batch-major [Bp, out_dim]; drop pad rows if any.
    out = out_packed.reshape(Bp, out_dim)
    return out[:B] if Bp != B else out


def init_params(key, input_size, freq_size, hidden, output_size):
    """Deterministic synthetic init (PyTorch-Linear-like uniform bounds)."""
    def linear(k, fan_in, fan_out):
        kw, kb = jax.random.split(k)
        bound = 1.0 / jnp.sqrt(float(fan_in))
        # stored pre-transposed as [in, out]; bias kept 2-D [1, out]
        w = jax.random.uniform(kw, (fan_in, fan_out), jnp.float32, -bound, bound)
        b = jax.random.uniform(kb, (1, fan_out), jnp.float32, -bound, bound)
        return w, b

    k1, k2, k3, k4 = jax.random.split(key, 4)
    w_in, b_in = linear(k1, input_size, hidden[0])        # input_mapping
    w_fr, b_fr = linear(k2, freq_size, hidden[1])         # freq_mapping
    w_rs, b_rs = linear(k3, hidden[0], hidden[1])         # resize Linear (fixed here)
    w_out, b_out = linear(k4, hidden[1], output_size)     # output_mapping
    return dict(w_in=w_in, b_in=b_in, w_fr=w_fr, b_fr=b_fr,
                w_rs=w_rs, b_rs=b_rs, w_out=w_out, b_out=b_out)


if __name__ == "__main__":
    key = jax.random.PRNGKey(0)
    k_param, k_iris, k_freq = jax.random.split(key, 3)

    batch = 8
    input_size = 4       # iris geometry dims
    freq_size = 16       # frequency samples
    output_size = 16     # predicted S11 samples

    params = init_params(k_param, input_size, freq_size, hidden_sizes, output_size)
    folded = fold_params(params)   # one-time param prep (fold + lane-pack)

    iris_dims = jax.random.normal(k_iris, (batch, input_size), jnp.float32)
    freq_samples = jax.random.normal(k_freq, (batch, freq_size), jnp.float32)

    out = kbnn_forward(iris_dims, freq_samples, folded)
    jax.block_until_ready(out)

    # pure-JAX reference (unfused, exact sigmoid) for sanity
    def ref(x, fq, p):
        silu = lambda v: v * jax.nn.sigmoid(v)
        xa = silu(x @ p["w_in"] + p["b_in"])
        fa = silu(fq @ p["w_fr"] + p["b_fr"])
        xr = xa @ p["w_rs"] + p["b_rs"]
        return (fa + xr) @ p["w_out"] + p["b_out"]

    expected = ref(iris_dims, freq_samples, params)
    assert out.shape == (batch, output_size)
    assert jnp.allclose(out, expected, atol=1e-4, rtol=1e-4), (
        float(jnp.max(jnp.abs(out - expected))))

    print("KERNEL_OK")
</pallas_src>

<mosaic_0001>
module attributes {stable_mosaic.version = 11 : i64} {
  func.func @kbnn_kernel(%arg0: i32, %arg1: memref<8x32xf32, #tpu.memory_space<vmem>>, %arg2: memref<8x128xf32, #tpu.memory_space<vmem>>, %arg3: memref<32x160xf32, #tpu.memory_space<vmem>>, %arg4: memref<1x160xf32, #tpu.memory_space<vmem>>, %arg5: memref<128x240xf32, #tpu.memory_space<vmem>>, %arg6: memref<1x240xf32, #tpu.memory_space<vmem>>, %arg7: memref<160x128xf32, #tpu.memory_space<vmem>>, %arg8: memref<240x128xf32, #tpu.memory_space<vmem>>, %arg9: memref<1x128xf32, #tpu.memory_space<vmem>>, %arg10: memref<8x128xf32, #tpu.memory_space<vmem>>) attributes {dimension_semantics = [#tpu.dimension_semantics<parallel>], iteration_bounds = array<i64: 1>, scalar_prefetch = 0 : i64, scratch_operands = 0 : i64, tpu.core_type = #tpu.core_type<tc>, window_params = [{transform_indices = @transform_0, window_bounds = array<i64: 8, 32>}, {transform_indices = @transform_1, window_bounds = array<i64: 8, 128>}, {pipeline_mode = #tpu.pipeline_mode<synchronous>, transform_indices = @transform_2, window_bounds = array<i64: 32, 160>}, {pipeline_mode = #tpu.pipeline_mode<synchronous>, transform_indices = @transform_3, window_bounds = array<i64: 1, 160>}, {pipeline_mode = #tpu.pipeline_mode<synchronous>, transform_indices = @transform_4, window_bounds = array<i64: 128, 240>}, {pipeline_mode = #tpu.pipeline_mode<synchronous>, transform_indices = @transform_5, window_bounds = array<i64: 1, 240>}, {pipeline_mode = #tpu.pipeline_mode<synchronous>, transform_indices = @transform_6, window_bounds = array<i64: 160, 128>}, {pipeline_mode = #tpu.pipeline_mode<synchronous>, transform_indices = @transform_7, window_bounds = array<i64: 240, 128>}, {pipeline_mode = #tpu.pipeline_mode<synchronous>, transform_indices = @transform_8, window_bounds = array<i64: 1, 128>}, {transform_indices = @transform_9, window_bounds = array<i64: 8, 128>}]} {
    %c0 = arith.constant 0 : index
    %c0_0 = arith.constant 0 : index
    %0 = vector.load %arg1[%c0, %c0_0] : memref<8x32xf32, #tpu.memory_space<vmem>>, vector<8x32xf32>
    %c0_1 = arith.constant 0 : index
    %c0_2 = arith.constant 0 : index
    %1 = vector.load %arg3[%c0_1, %c0_2] : memref<32x160xf32, #tpu.memory_space<vmem>>, vector<32x160xf32>
    %cst = arith.constant dense<0.000000e+00> : vector<8x160xf32>
    %2 = tpu.matmul %0, %1, %cst {dimension_numbers = #tpu.dot_dimension_numbers<[1], [0], [0], [1], [0, 0, 1, 1], [], []>} : vector<8x32xf32>, vector<32x160xf32>, vector<8x160xf32> -> vector<8x160xf32>
    %c0_3 = arith.constant 0 : index
    %c0_4 = arith.constant 0 : index
    %3 = vector.load %arg4[%c0_3, %c0_4] : memref<1x160xf32, #tpu.memory_space<vmem>>, vector<1x160xf32>
    %4 = vector.broadcast %3 : vector<1x160xf32> to vector<8x160xf32>
    %5 = arith.addf %2, %4 : vector<8x160xf32>
    %cst_5 = arith.constant 5.000000e-01 : f32
    %6 = vector.broadcast %cst_5 : f32 to vector<8x160xf32>
    %7 = arith.mulf %6, %5 : vector<8x160xf32>
    %8 = math.tanh %7 : vector<8x160xf32>
    %cst_6 = arith.constant 5.000000e-01 : f32
    %9 = vector.broadcast %cst_6 : f32 to vector<8x160xf32>
    %10 = arith.mulf %9, %8 : vector<8x160xf32>
    %cst_7 = arith.constant 5.000000e-01 : f32
    %11 = vector.broadcast %cst_7 : f32 to vector<8x160xf32>
    %12 = arith.addf %10, %11 : vector<8x160xf32>
    %13 = arith.mulf %5, %12 : vector<8x160xf32>
    %c0_8 = arith.constant 0 : index
    %c0_9 = arith.constant 0 : index
    %14 = vector.load %arg2[%c0_8, %c0_9] : memref<8x128xf32, #tpu.memory_space<vmem>>, vector<8x128xf32>
    %c0_10 = arith.constant 0 : index
    %c0_11 = arith.constant 0 : index
    %15 = vector.load %arg5[%c0_10, %c0_11] : memref<128x240xf32, #tpu.memory_space<vmem>>, vector<128x240xf32>
    %cst_12 = arith.constant dense<0.000000e+00> : vector<8x240xf32>
    %16 = tpu.matmul %14, %15, %cst_12 {dimension_numbers = #tpu.dot_dimension_numbers<[1], [0], [0], [1], [0, 0, 1, 1], [], []>} : vector<8x128xf32>, vector<128x240xf32>, vector<8x240xf32> -> vector<8x240xf32>
    %c0_13 = arith.constant 0 : index
    %c0_14 = arith.constant 0 : index
    %17 = vector.load %arg6[%c0_13, %c0_14] : memref<1x240xf32, #tpu.memory_space<vmem>>, vector<1x240xf32>
    %18 = vector.broadcast %17 : vector<1x240xf32> to vector<8x240xf32>
    %19 = arith.addf %16, %18 : vector<8x240xf32>
    %cst_15 = arith.constant 5.000000e-01 : f32
    %20 = vector.broadcast %cst_15 : f32 to vector<8x240xf32>
    %21 = arith.mulf %20, %19 : vector<8x240xf32>
    %22 = math.tanh %21 : vector<8x240xf32>
    %cst_16 = arith.constant 5.000000e-01 : f32
    %23 = vector.broadcast %cst_16 : f32 to vector<8x240xf32>
    %24 = arith.mulf %23, %22 : vector<8x240xf32>
    %cst_17 = arith.constant 5.000000e-01 : f32
    %25 = vector.broadcast %cst_17 : f32 to vector<8x240xf32>
    %26 = arith.addf %24, %25 : vector<8x240xf32>
    %27 = arith.mulf %19, %26 : vector<8x240xf32>
    %c0_18 = arith.constant 0 : index
    %c0_19 = arith.constant 0 : index
    %28 = vector.load %arg7[%c0_18, %c0_19] : memref<160x128xf32, #tpu.memory_space<vmem>>, vector<160x128xf32>
    %cst_20 = arith.constant dense<0.000000e+00> : vector<8x128xf32>
    %29 = tpu.matmul %13, %28, %cst_20 {dimension_numbers = #tpu.dot_dimension_numbers<[1], [0], [0], [1], [0, 0, 1, 1], [], []>} : vector<8x160xf32>, vector<160x128xf32>, vector<8x128xf32> -> vector<8x128xf32>
    %c0_21 = arith.constant 0 : index
    %c0_22 = arith.constant 0 : index
    %30 = vector.load %arg8[%c0_21, %c0_22] : memref<240x128xf32, #tpu.memory_space<vmem>>, vector<240x128xf32>
    %cst_23 = arith.constant dense<0.000000e+00> : vector<8x128xf32>
    %31 = tpu.matmul %27, %30, %cst_23 {dimension_numbers = #tpu.dot_dimension_numbers<[1], [0], [0], [1], [0, 0, 1, 1], [], []>} : vector<8x240xf32>, vector<240x128xf32>, vector<8x128xf32> -> vector<8x128xf32>
    %32 = arith.addf %29, %31 : vector<8x128xf32>
    %c0_24 = arith.constant 0 : index
    %c0_25 = arith.constant 0 : index
    %33 = vector.load %arg9[%c0_24, %c0_25] : memref<1x128xf32, #tpu.memory_space<vmem>>, vector<1x128xf32>
    %34 = vector.broadcast %33 : vector<1x128xf32> to vector<8x128xf32>
    %35 = arith.addf %32, %34 : vector<8x128xf32>
    %c0_26 = arith.constant 0 : index
    %c0_27 = arith.constant 0 : index
    %36 = vector.load %arg10[%c0_26, %c0_27] : memref<8x128xf32, #tpu.memory_space<vmem>>, vector<8x128xf32>
    tpu.vector_store %arg10[%c0_26, %c0_27], %35 {strides = array<i32>} : memref<8x128xf32, #tpu.memory_space<vmem>>, vector<8x128xf32>,
    return
  }
  func.func @transform_0(%arg0: i32) -> (i32, i32) {
    %c0_i32 = arith.constant 0 : i32
    %c0_i32_0 = arith.constant 0 : i32
    return %arg0, %c0_i32 : i32, i32
  }
  func.func @transform_1(%arg0: i32) -> (i32, i32) {
    %c0_i32 = arith.constant 0 : i32
    %c0_i32_0 = arith.constant 0 : i32
    return %arg0, %c0_i32 : i32, i32
  }
  func.func @transform_2(%arg0: i32) -> (i32, i32) {
    %c0_i32 = arith.constant 0 : i32
    %c0_i32_0 = arith.constant 0 : i32
    %c0_i32_1 = arith.constant 0 : i32
    return %c0_i32, %c0_i32_0 : i32, i32
  }
  func.func @transform_3(%arg0: i32) -> (i32, i32) {
    %c0_i32 = arith.constant 0 : i32
    %c0_i32_0 = arith.constant 0 : i32
    %c0_i32_1 = arith.constant 0 : i32
    return %c0_i32, %c0_i32_0 : i32, i32
  }
  func.func @transform_4(%arg0: i32) -> (i32, i32) {
    %c0_i32 = arith.constant 0 : i32
    %c0_i32_0 = arith.constant 0 : i32
    %c0_i32_1 = arith.constant 0 : i32
    return %c0_i32, %c0_i32_0 : i32, i32
  }
  func.func @transform_5(%arg0: i32) -> (i32, i32) {
    %c0_i32 = arith.constant 0 : i32
    %c0_i32_0 = arith.constant 0 : i32
    %c0_i32_1 = arith.constant 0 : i32
    return %c0_i32, %c0_i32_0 : i32, i32
  }
  func.func @transform_6(%arg0: i32) -> (i32, i32) {
    %c0_i32 = arith.constant 0 : i32
    %c0_i32_0 = arith.constant 0 : i32
    %c0_i32_1 = arith.constant 0 : i32
    return %c0_i32, %c0_i32_0 : i32, i32
  }
  func.func @transform_7(%arg0: i32) -> (i32, i32) {
    %c0_i32 = arith.constant 0 : i32
    %c0_i32_0 = arith.constant 0 : i32
    %c0_i32_1 = arith.constant 0 : i32
    return %c0_i32, %c0_i32_0 : i32, i32
  }
  func.func @transform_8(%arg0: i32) -> (i32, i32) {
    %c0_i32 = arith.constant 0 : i32
    %c0_i32_0 = arith.constant 0 : i32
    %c0_i32_1 = arith.constant 0 : i32
    return %c0_i32, %c0_i32_0 : i32, i32
  }
  func.func @transform_9(%arg0: i32) -> (i32, i32) {
    %c0_i32 = arith.constant 0 : i32
    %c0_i32_0 = arith.constant 0 : i32
    return %arg0, %c0_i32 : i32, i32
  }
}

</mosaic_0001>

<llo_original>
// kernel: tpu_custom_call.1
$region0: #{tpu_custom_call.1}
  #allocation0 [shape = 'u32[]', space=smem, size = 0x4, offset = 0x4, fixed_abs, tag = 'smem constant byte address 0x4 - core index']
  #allocation1 [shape = 'u32[72,128]{1,0:T(1,128)}', space=vmem, size = 0x9000, scoped, tag = 'internal scratch']
  %s0 = inlined_call_operand.vmem [shape: f32[1,32], index: 0, kind: input, shape index: {}]
  %s1 = inlined_call_operand.vmem [shape: f32[1,128], index: 1, kind: input, shape index: {}]
  %s2 = inlined_call_operand.vmem [shape: f32[32,160], index: 2, kind: input, shape index: {}]
  %s3 = inlined_call_operand.vmem [shape: f32[1,160], index: 3, kind: input, shape index: {}]
  %s4 = inlined_call_operand.vmem [shape: f32[128,240], index: 4, kind: input, shape index: {}]
  %s5 = inlined_call_operand.vmem [shape: f32[1,240], index: 5, kind: input, shape index: {}]
  %s6 = inlined_call_operand.vmem [shape: f32[160,128], index: 6, kind: input, shape index: {}]
  %s7 = inlined_call_operand.vmem [shape: f32[240,128], index: 7, kind: input, shape index: {}]
  %s8 = inlined_call_operand.vmem [shape: f32[1,128], index: 8, kind: input, shape index: {}]
  %s9 = inlined_call_operand.hbm [shape: f32[1,128], index: 9, kind: output, shape index: {}]
  %s10 = sld [smem:[#allocation0]]
  $region46: #{tpu_custom_call.1} parent=0
    _
  %s12 = ssub.s32 1, %s10
  %s13 = scalar_select 0, %s12, %s10
  $region1: #{tpu_custom_call.1} parent=0
    #allocation2 [shape = 'u8[4096]{0}', space=vmem, size = 0x1000, scoped, tag = 'output window, operand 0, single buffered']
    #allocation3 [shape = 's32[1]{0}', space=sflag, size = 0x4, scoped, tag = 'scoped memory for tpu_custom_call.1']
    %14 = vsyncpa [#allocation3], 0
    // Predicated region
    $region2: #{tpu_custom_call.1} parent=1 // pred_check
      _
    $region3: #{tpu_custom_call.1} parent=1 // pred_check_branch
      %16 = sbr.rel (0) target = $region5
    $region4: #{tpu_custom_call.1} parent=1 // pred_region
      _
    $region5: #{tpu_custom_call.1} parent=1 // pred_fallthru
      _
    // Predicated region
    $region6: #{tpu_custom_call.1} parent=1 // pred_check
      _
    $region7: #{tpu_custom_call.1} parent=1 // pred_check_branch
      %18 = sbr.rel (0) target = $region9
    $region8: #{tpu_custom_call.1} parent=1 // pred_region
      _
    $region9: #{tpu_custom_call.1} parent=1 // pred_fallthru
      _
    // Predicated region
    $region10: #{tpu_custom_call.1} parent=1 // pred_check
      _
    $region11: #{tpu_custom_call.1} parent=1 // pred_check_branch
      %20 = sbr.rel (0) target = $region13
    $region12: #{tpu_custom_call.1} parent=1 // pred_region
      _
    $region13: #{tpu_custom_call.1} parent=1 // pred_fallthru
      _
    // Predicated region
    $region14: #{tpu_custom_call.1} parent=1 // pred_check
      _
    $region15: #{tpu_custom_call.1} parent=1 // pred_check_branch
      %22 = sbr.rel (0) target = $region17
    $region16: #{tpu_custom_call.1} parent=1 // pred_region
      _
    $region17: #{tpu_custom_call.1} parent=1 // pred_fallthru
      _
    // Predicated region
    $region18: #{tpu_custom_call.1} parent=1 // pred_check
      _
    $region19: #{tpu_custom_call.1} parent=1 // pred_check_branch
      %24 = sbr.rel (0) target = $region21
    $region20: #{tpu_custom_call.1} parent=1 // pred_region
      _
    $region21: #{tpu_custom_call.1} parent=1 // pred_fallthru
      _
    // Predicated region
    $region22: #{tpu_custom_call.1} parent=1 // pred_check
      _
    $region23: #{tpu_custom_call.1} parent=1 // pred_check_branch
      %26 = sbr.rel (0) target = $region25
    $region24: #{tpu_custom_call.1} parent=1 // pred_region
      _
    $region25: #{tpu_custom_call.1} parent=1 // pred_fallthru
      _
    // Predicated region
    $region26: #{tpu_custom_call.1} parent=1 // pred_check
      _
    $region27: #{tpu_custom_call.1} parent=1 // pred_check_branch
      %28 = sbr.rel (0) target = $region29
    $region28: #{tpu_custom_call.1} parent=1 // pred_region
      _
    $region29: #{tpu_custom_call.1} parent=1 // pred_fallthru
      _
    // Predicated region
    $region30: #{tpu_custom_call.1} parent=1 // pred_check
      _
    $region31: #{tpu_custom_call.1} parent=1 // pred_check_branch
      %30 = sbr.rel (0) target = $region33
    $region32: #{tpu_custom_call.1} parent=1 // pred_region
      _
    $region33: #{tpu_custom_call.1} parent=1 // pred_fallthru
      _
    // Predicated region
    $region34: #{tpu_custom_call.1} parent=1 // pred_check
      _
    $region35: #{tpu_custom_call.1} parent=1 // pred_check_branch
      %32 = sbr.rel (0) target = $region37
    $region36: #{tpu_custom_call.1} parent=1 // pred_region
      _
    $region37: #{tpu_custom_call.1} parent=1 // pred_fallthru
      _
    %v33 = vld [vmem:[%s0] sm:$0xff]
    %v34 = vld [vmem:[%s2] sm:$0xff]
    %v35 = vld [vmem:[%s2 + $0x8] sm:$0xff]
    %v36 = vld [vmem:[%s2 + $0x10] sm:$0xff]
    %v37 = vld [vmem:[%s2 + $0x18] sm:$0xff]
    %v38 = vld [vmem:[%s2 + $0x20] sm:$0xff]
    %v39 = vld [vmem:[%s2 + $0x28] sm:$0xff]
    %v40 = vld [vmem:[%s2 + $0x30] sm:$0xff]
    %v41 = vld [vmem:[%s2 + $0x38] sm:$0xff]
    %v42 = vld [vmem:[%s3] sm:$0x3]
    %v44 = vperm.slane %v42, 0
    %v45 = vperm.slane %v42, 1
    %vm48 = vcmask 261120
    %v50 = vsel %vm48, %v33, 0
    %52 = vmatpush.msra.mxu0 0.0
    %53 = vmatpush.msra.mxu0 0.0
    %54 = vmatpush.msra.mxu0 0.0
    %55 = vmatpush.msra.mxu0 0.0
    %56 = vmatpush.msra.mxu0 0.0
    %57 = vmatpush.msra.mxu0 0.0
    %58 = vmatpush.msra.mxu0 0.0
    %59 = vmatpush.msra.mxu0 0.0
    %60 = vmatpush.msra.mxu0 0.0
    %61 = vmatpush.msra.mxu0 0.0
    %62 = vmatpush.msra.mxu0 0.0
    %63 = vmatpush.msra.mxu0 0.0
    %64 = vmatpush.msra.mxu0 %v40
    %65 = vmatpush.msra.mxu0 %v38
    %66 = vmatpush.msra.mxu0 %v36
    %67 = vmatpush.msra.mxu0 %v34
    %68 = vmatmul.f32.gmra.mxu0 %v50
    %v69 = vpop.f32.mrf.mxu0
    %v70 = vadd.f32 %v44, %v69
    %71 = vdwg.mxu0
    %72 = vmatpush.msra.mxu0 0.0
    %73 = vmatpush.msra.mxu0 0.0
    %74 = vmatpush.msra.mxu0 0.0
    %75 = vmatpush.msra.mxu0 0.0
    %76 = vmatpush.msra.mxu0 0.0
    %77 = vmatpush.msra.mxu0 0.0
    %78 = vmatpush.msra.mxu0 0.0
    %79 = vmatpush.msra.mxu0 0.0
    %80 = vmatpush.msra.mxu0 0.0
    %81 = vmatpush.msra.mxu0 0.0
    %82 = vmatpush.msra.mxu0 0.0
    %83 = vmatpush.msra.mxu0 0.0
    %84 = vmatpush.msra.mxu0 %v41
    %85 = vmatpush.msra.mxu0 %v39
    %86 = vmatpush.msra.mxu0 %v37
    %87 = vmatpush.msra.mxu0 %v35
    %88 = vmatmul.f32.gmra.mxu0 %v50
    %v89 = vpop.f32.mrf.mxu0
    %v90 = vadd.f32 %v45, %v89
    %91 = vdwg.mxu0
    %v92 = vmul.f32 %v70, 0.5
    %v93 = vmul.f32 %v90, 0.5
    %v94 = vtanh.pop %v92
    %v95 = vtanh.pop %v93
    %v96 = vmul.f32 %v94, 0.5
    %v97 = vmul.f32 %v95, 0.5
    %v98 = vadd.f32 %v96, 0.5
    %v99 = vadd.f32 %v97, 0.5
    %v100 = vmul.f32 %v70, %v98
    %v101 = vmul.f32 %v90, %v99
    %v102 = vld [vmem:[%s1] sm:$0xff]
    %v103 = vld [vmem:[%s4] sm:$0xff]
    %v104 = vld [vmem:[%s4 + $0x8] sm:$0xff]
    %v105 = vld [vmem:[%s4 + $0x10] sm:$0xff]
    %v106 = vld [vmem:[%s4 + $0x18] sm:$0xff]
    %v107 = vld [vmem:[%s4 + $0x20] sm:$0xff]
    %v108 = vld [vmem:[%s4 + $0x28] sm:$0xff]
    %v109 = vld [vmem:[%s4 + $0x30] sm:$0xff]
    %v110 = vld [vmem:[%s4 + $0x38] sm:$0xff]
    %v111 = vld [vmem:[%s4 + $0x40] sm:$0xff]
    %v112 = vld [vmem:[%s4 + $0x48] sm:$0xff]
    %v113 = vld [vmem:[%s4 + $0x50] sm:$0xff]
    %v114 = vld [vmem:[%s4 + $0x58] sm:$0xff]
    %v115 = vld [vmem:[%s4 + $0x60] sm:$0xff]
    %v116 = vld [vmem:[%s4 + $0x68] sm:$0xff]
    %v117 = vld [vmem:[%s4 + $0x70] sm:$0xff]
    %v118 = vld [vmem:[%s4 + $0x78] sm:$0xff]
    %v119 = vld [vmem:[%s4 + $0x80] sm:$0xff]
    %v120 = vld [vmem:[%s4 + $0x88] sm:$0xff]
    %v121 = vld [vmem:[%s4 + $0x90] sm:$0xff]
    %v122 = vld [vmem:[%s4 + $0x98] sm:$0xff]
    %v123 = vld [vmem:[%s4 + $0xa0] sm:$0xff]
    %v124 = vld [vmem:[%s4 + $0xa8] sm:$0xff]
    %v125 = vld [vmem:[%s4 + $0xb0] sm:$0xff]
    %v126 = vld [vmem:[%s4 + $0xb8] sm:$0xff]
    %v127 = vld [vmem:[%s4 + $0xc0] sm:$0xff]
    %v128 = vld [vmem:[%s4 + $0xc8] sm:$0xff]
    %v129 = vld [vmem:[%s4 + $0xd0] sm:$0xff]
    %v130 = vld [vmem:[%s4 + $0xd8] sm:$0xff]
    %v131 = vld [vmem:[%s4 + $0xe0] sm:$0xff]
    %v132 = vld [vmem:[%s4 + $0xe8] sm:$0xff]
    %v133 = vld [vmem:[%s4 + $0xf0] sm:$0xff]
    %v134 = vld [vmem:[%s4 + $0xf8] sm:$0xff]
    %v135 = vld [vmem:[%s5] sm:$0x3]
    %v137 = vperm.slane %v135, 0
    %v138 = vperm.slane %v135, 1
    %141 = vmatpush.msra.mxu0 %v133
    %142 = vmatpush.msra.mxu0 %v131
    %143 = vmatpush.msra.mxu0 %v129
    %144 = vmatpush.msra.mxu0 %v127
    %145 = vmatpush.msra.mxu0 %v125
    %146 = vmatpush.msra.mxu0 %v123
    %147 = vmatpush.msra.mxu0 %v121
    %148 = vmatpush.msra.mxu0 %v119
    %149 = vmatpush.msra.mxu0 %v117
    %150 = vmatpush.msra.mxu0 %v115
    %151 = vmatpush.msra.mxu0 %v113
    %152 = vmatpush.msra.mxu0 %v111
    %153 = vmatpush.msra.mxu0 %v109
    %154 = vmatpush.msra.mxu0 %v107
    %155 = vmatpush.msra.mxu0 %v105
    %156 = vmatpush.msra.mxu0 %v103
    %157 = vmatmul.f32.gmra.mxu0 %v102
    %v158 = vpop.f32.mrf.mxu0
    %v159 = vadd.f32 %v137, %v158
    %160 = vdwg.mxu0
    %161 = vmatpush.msra.mxu0 %v134
    %162 = vmatpush.msra.mxu0 %v132
    %163 = vmatpush.msra.mxu0 %v130
    %164 = vmatpush.msra.mxu0 %v128
    %165 = vmatpush.msra.mxu0 %v126
    %166 = vmatpush.msra.mxu0 %v124
    %167 = vmatpush.msra.mxu0 %v122
    %168 = vmatpush.msra.mxu0 %v120
    %169 = vmatpush.msra.mxu0 %v118
    %170 = vmatpush.msra.mxu0 %v116
    %171 = vmatpush.msra.mxu0 %v114
    %172 = vmatpush.msra.mxu0 %v112
    %173 = vmatpush.msra.mxu0 %v110
    %174 = vmatpush.msra.mxu0 %v108
    %175 = vmatpush.msra.mxu0 %v106
    %176 = vmatpush.msra.mxu0 %v104
    %177 = vmatmul.f32.gmra.mxu0 %v102
    %v178 = vpop.f32.mrf.mxu0
    %v179 = vadd.f32 %v138, %v178
    %180 = vdwg.mxu0
    %v181 = vmul.f32 %v159, 0.5
    %v182 = vmul.f32 %v179, 0.5
    %v183 = vtanh.pop %v181
    %v184 = vtanh.pop %v182
    %v185 = vmul.f32 %v183, 0.5
    %v186 = vmul.f32 %v184, 0.5
    %v187 = vadd.f32 %v185, 0.5
    %v188 = vadd.f32 %v186, 0.5
    %v189 = vmul.f32 %v159, %v187
    %v190 = vmul.f32 %v179, %v188
    %v191 = vld [vmem:[%s6] sm:$0xff]
    %v192 = vld [vmem:[%s6 + $0x8] sm:$0xff]
    %v193 = vld [vmem:[%s6 + $0x10] sm:$0xff]
    %v194 = vld [vmem:[%s6 + $0x18] sm:$0xff]
    %v195 = vld [vmem:[%s6 + $0x20] sm:$0xff]
    %v196 = vld [vmem:[%s6 + $0x28] sm:$0xff]
    %v197 = vld [vmem:[%s6 + $0x30] sm:$0xff]
    %v198 = vld [vmem:[%s6 + $0x38] sm:$0xff]
    %v199 = vld [vmem:[%s6 + $0x40] sm:$0xff]
    %v200 = vld [vmem:[%s6 + $0x48] sm:$0xff]
    %v201 = vld [vmem:[%s6 + $0x50] sm:$0xff]
    %v202 = vld [vmem:[%s6 + $0x58] sm:$0xff]
    %v203 = vld [vmem:[%s6 + $0x60] sm:$0xff]
    %v204 = vld [vmem:[%s6 + $0x68] sm:$0xff]
    %v205 = vld [vmem:[%s6 + $0x70] sm:$0xff]
    %v206 = vld [vmem:[%s6 + $0x78] sm:$0xff]
    %v207 = vld [vmem:[%s6 + $0x80] sm:$0xff]
    %v208 = vld [vmem:[%s6 + $0x88] sm:$0xff]
    %v209 = vld [vmem:[%s6 + $0x90] sm:$0xff]
    %v210 = vld [vmem:[%s6 + $0x98] sm:$0xff]
    %v211 = vld [vmem:[%s7] sm:$0xff]
    %v212 = vld [vmem:[%s7 + $0x8] sm:$0xff]
    %v213 = vld [vmem:[%s7 + $0x10] sm:$0xff]
    %v214 = vld [vmem:[%s7 + $0x18] sm:$0xff]
    %v215 = vld [vmem:[%s7 + $0x20] sm:$0xff]
    %v216 = vld [vmem:[%s7 + $0x28] sm:$0xff]
    %v217 = vld [vmem:[%s7 + $0x30] sm:$0xff]
    %v218 = vld [vmem:[%s7 + $0x38] sm:$0xff]
    %v219 = vld [vmem:[%s7 + $0x40] sm:$0xff]
    %v220 = vld [vmem:[%s7 + $0x48] sm:$0xff]
    %v221 = vld [vmem:[%s7 + $0x50] sm:$0xff]
    %v222 = vld [vmem:[%s7 + $0x58] sm:$0xff]
    %v223 = vld [vmem:[%s7 + $0x60] sm:$0xff]
    %v224 = vld [vmem:[%s7 + $0x68] sm:$0xff]
    %v225 = vld [vmem:[%s7 + $0x70] sm:$0xff]
    %v226 = vld [vmem:[%s7 + $0x78] sm:$0xff]
    %v227 = vld [vmem:[%s7 + $0x80] sm:$0xff]
    %v228 = vld [vmem:[%s7 + $0x88] sm:$0xff]
    %v229 = vld [vmem:[%s7 + $0x90] sm:$0xff]
    %v230 = vld [vmem:[%s7 + $0x98] sm:$0xff]
    %v231 = vld [vmem:[%s7 + $0xa0] sm:$0xff]
    %v232 = vld [vmem:[%s7 + $0xa8] sm:$0xff]
    %v233 = vld [vmem:[%s7 + $0xb0] sm:$0xff]
    %v234 = vld [vmem:[%s7 + $0xb8] sm:$0xff]
    %v235 = vld [vmem:[%s7 + $0xc0] sm:$0xff]
    %v236 = vld [vmem:[%s7 + $0xc8] sm:$0xff]
    %v237 = vld [vmem:[%s7 + $0xd0] sm:$0xff]
    %v238 = vld [vmem:[%s7 + $0xd8] sm:$0xff]
    %v239 = vld [vmem:[%s7 + $0xe0] sm:$0xff]
    %v240 = vld [vmem:[%s7 + $0xe8] sm:$0xff]
    %vm241 = vcmask 916480
    %v243 = vsel %vm241, %v190, 0
    %245 = vmatpush.msra.mxu0 %v226
    %246 = vmatpush.msra.mxu0 %v225
    %247 = vmatpush.msra.mxu0 %v224
    %248 = vmatpush.msra.mxu0 %v223
    %249 = vmatpush.msra.mxu0 %v222
    %250 = vmatpush.msra.mxu0 %v221
    %251 = vmatpush.msra.mxu0 %v220
    %252 = vmatpush.msra.mxu0 %v219
    %253 = vmatpush.msra.mxu0 %v218
    %254 = vmatpush.msra.mxu0 %v217
    %255 = vmatpush.msra.mxu0 %v216
    %256 = vmatpush.msra.mxu0 %v215
    %257 = vmatpush.msra.mxu0 %v214
    %258 = vmatpush.msra.mxu0 %v213
    %259 = vmatpush.msra.mxu0 %v212
    %260 = vmatpush.msra.mxu0 %v211
    %261 = vmatmul.f32.gmra.mxu0 %v189
    %v262 = vpop.f32.mrf.mxu0
    %v263 = vadd.f32 0.0, %v262
    %264 = vdwg.mxu0
    %265 = vmatpush.msra.mxu0 0.0
    %266 = vmatpush.msra.mxu0 0.0
    %267 = vmatpush.msra.mxu0 %v240
    %268 = vmatpush.msra.mxu0 %v239
    %269 = vmatpush.msra.mxu0 %v238
    %270 = vmatpush.msra.mxu0 %v237
    %271 = vmatpush.msra.mxu0 %v236
    %272 = vmatpush.msra.mxu0 %v235
    %273 = vmatpush.msra.mxu0 %v234
    %274 = vmatpush.msra.mxu0 %v233
    %275 = vmatpush.msra.mxu0 %v232
    %276 = vmatpush.msra.mxu0 %v231
    %277 = vmatpush.msra.mxu0 %v230
    %278 = vmatpush.msra.mxu0 %v229
    %279 = vmatpush.msra.mxu0 %v228
    %280 = vmatpush.msra.mxu0 %v227
    %281 = vmatmul.f32.gmra.mxu0 %v243
    %v282 = vpop.f32.mrf.mxu0
    %v283 = vadd.f32 %v263, %v282
    %284 = vdwg.mxu0
    %v286 = vsel %vm48, %v101, 0
    %288 = vmatpush.msra.mxu0 %v206
    %289 = vmatpush.msra.mxu0 %v205
    %290 = vmatpush.msra.mxu0 %v204
    %291 = vmatpush.msra.mxu0 %v203
    %292 = vmatpush.msra.mxu0 %v202
    %293 = vmatpush.msra.mxu0 %v201
    %294 = vmatpush.msra.mxu0 %v200
    %295 = vmatpush.msra.mxu0 %v199
    %296 = vmatpush.msra.mxu0 %v198
    %297 = vmatpush.msra.mxu0 %v197
    %298 = vmatpush.msra.mxu0 %v196
    %299 = vmatpush.msra.mxu0 %v195
    %300 = vmatpush.msra.mxu0 %v194
    %301 = vmatpush.msra.mxu0 %v193
    %302 = vmatpush.msra.mxu0 %v192
    %303 = vmatpush.msra.mxu0 %v191
    %304 = vmatmul.f32.gmra.mxu0 %v100
    %v305 = vpop.f32.mrf.mxu0
    %v306 = vadd.f32 %v283, %v305
    %307 = vdwg.mxu0
    %308 = vmatpush.msra.mxu0 0.0
    %309 = vmatpush.msra.mxu0 0.0
    %310 = vmatpush.msra.mxu0 0.0
    %311 = vmatpush.msra.mxu0 0.0
    %312 = vmatpush.msra.mxu0 0.0
    %313 = vmatpush.msra.mxu0 0.0
    %314 = vmatpush.msra.mxu0 0.0
    %315 = vmatpush.msra.mxu0 0.0
    %316 = vmatpush.msra.mxu0 0.0
    %317 = vmatpush.msra.mxu0 0.0
    %318 = vmatpush.msra.mxu0 0.0
    %319 = vmatpush.msra.mxu0 0.0
    %320 = vmatpush.msra.mxu0 %v210
    %321 = vmatpush.msra.mxu0 %v209
    %322 = vmatpush.msra.mxu0 %v208
    %323 = vmatpush.msra.mxu0 %v207
    %324 = vmatmul.f32.gmra.mxu0 %v286
    %v325 = vpop.f32.mrf.mxu0
    %v326 = vadd.f32 %v306, %v325
    %327 = vdwg.mxu0
    %v328 = vld [vmem:[%s8] sm:$0x1]
    %v330 = vperm.slane %v328, 0
    %v332 = vadd.f32 %v326, %v330
    %333 = vst [vmem:[#allocation2] sm:$0xff] %v332
    // Predicated region
    $region38: #{tpu_custom_call.1} parent=1 // pred_check
      _
    $region39: #{tpu_custom_call.1} parent=1 // pred_check_branch
      %335 = sbr.rel (0) target = $region41
    $region40: #{tpu_custom_call.1} parent=1 // pred_region
      %337 = vsyncadd [#allocation3], 112
      %s338 = sshll.u32 [#allocation2], 4
      %s339 = int_to_ptr.vmem [resolvable:$true] %s338
      %s340 = sshll.u32 %s9, 4
      %s341 = int_to_ptr.hbm [resolvable:$true] %s340
      %346 = dma.vmem_to_hbm [thread:$0]  %s339, 16, %s341, [#allocation3], 16, 16, 1
    $region41: #{tpu_custom_call.1} parent=1 // pred_fallthru
      _
    // Predicated region
    $region42: #{tpu_custom_call.1} parent=1 // pred_check
      _
    $region43: #{tpu_custom_call.1} parent=1 // pred_check_branch
      %348 = sbr.rel (0) target = $region45
    $region44: #{tpu_custom_call.1} parent=1 // pred_region
      %350 = dma.done [#allocation3], 128
    $region45: #{tpu_custom_call.1} parent=1 // pred_fallthru
      _
    %351 = vsyncpa [#allocation3], 1

</llo_original>
